<compile_context>
chip_gen: v7x
topology: tpu7x:2x2x1
jax: 0.10.0
libtpu: 0.0.40
codegen_flags: <defaults>
</compile_context>

<pallas_src>
from functools import partial

import jax
import jax.numpy as jnp
from jax.experimental import pallas as pl
from jax.experimental.pallas import tpu as pltpu


def _round_up(n, m):
    return ((n + m - 1) // m) * m


def _pack_layer(w_ih, w_hh, b_ih, b_hh, H, Hp, Dp, Kp):
    """Pack one GRUCell layer (PyTorch layout) into a single [Kp, 4*Hp] weight and
    [1, 4*Hp] bias.  Column blocks (each Hp wide, only first H lanes meaningful):
        [ r | z | n_input | n_hidden ]
    Row blocks: rows [0:in_dim] multiply the layer input (x / previous activation),
    rows [Dp:Dp+H] multiply this layer's hidden state. All other entries are zero.
    """
    w_ih = jnp.asarray(w_ih, jnp.float32)          # [3H, in_dim]
    w_hh = jnp.asarray(w_hh, jnp.float32)          # [3H, H]
    b_ih = jnp.asarray(b_ih, jnp.float32)          # [3H]
    b_hh = jnp.asarray(b_hh, jnp.float32)          # [3H]
    in_dim = w_ih.shape[1]
    wi = w_ih.T                                    # [in_dim, 3H]
    wh = w_hh.T                                    # [H, 3H]

    W = jnp.zeros((Kp, 4 * Hp), jnp.float32)
    # input rows
    W = W.at[:in_dim, 0:H].set(wi[:, 0:H])                         # r
    W = W.at[:in_dim, Hp:Hp + H].set(wi[:, H:2 * H])               # z
    W = W.at[:in_dim, 2 * Hp:2 * Hp + H].set(wi[:, 2 * H:3 * H])   # n (input part)
    # hidden rows
    W = W.at[Dp:Dp + H, 0:H].set(wh[:, 0:H])                       # r
    W = W.at[Dp:Dp + H, Hp:Hp + H].set(wh[:, H:2 * H])             # z
    W = W.at[Dp:Dp + H, 3 * Hp:3 * Hp + H].set(wh[:, 2 * H:3 * H]) # n (hidden part)

    b = jnp.zeros((1, 4 * Hp), jnp.float32)
    b = b.at[0, 0:H].set(b_ih[0:H] + b_hh[0:H])                    # folded r bias
    b = b.at[0, Hp:Hp + H].set(b_ih[H:2 * H] + b_hh[H:2 * H])      # folded z bias
    b = b.at[0, 2 * Hp:2 * Hp + H].set(b_ih[2 * H:3 * H])          # b_in
    b = b.at[0, 3 * Hp:3 * Hp + H].set(b_hh[2 * H:3 * H])          # b_hn
    return W, b


def _make_kernel(Dp, Hp):
    """Fused stacked-GRUCell kernel.  Grid = (batch_tile, layer); the running
    activation [TB, Dp] and this layer's hidden [TB, Hp] live side-by-side in the
    VMEM scratch `xh_ref` ([TB, Dp + Hp]) so each layer is exactly one MXU push."""

    def kernel(x_ref, h_ref, w_ref, b_ref, out_ref, xh_ref):
        layer = pl.program_id(1)

        # Layer 0 of each batch tile: seed the activation slot with the padded input.
        @pl.when(layer == 0)
        def _seed():
            xh_ref[:, :Dp] = x_ref[...]

        h_prev = h_ref[0]                       # [TB, Hp] initial hidden for this layer
        xh_ref[:, Dp:] = h_prev                 # hidden slot of the carry

        # Single fat MXU matmul: [TB, Kp] @ [Kp, 4*Hp] + folded biases.
        g = jnp.dot(xh_ref[...], w_ref[0],
                    preferred_element_type=jnp.float32) + b_ref[0]

        # Lane-aligned (multiples of 128) gate views.
        r = jax.nn.sigmoid(g[:, :Hp])
        z = jax.nn.sigmoid(g[:, Hp:2 * Hp])
        n = jnp.tanh(g[:, 2 * Hp:3 * Hp] + r * g[:, 3 * Hp:])
        h_new = (1.0 - z) * n + z * h_prev      # padded lanes stay exactly 0

        out_ref[0] = h_new.astype(out_ref.dtype)

        # Feed the new activation into the input slot for the next layer.
        xh_ref[:, :Hp] = h_new
        if Dp > Hp:  # only when the layer-0 input is wider than the (padded) hidden
            xh_ref[:, Hp:Dp] = jnp.zeros((xh_ref.shape[0], Dp - Hp), jnp.float32)

    return kernel


@partial(jax.jit, static_argnames=("dims",))
def _stacked_gru_forward(x, h_st, w_all, b_all, *, dims):
    """x: [B, in_dim0], h_st: [L, B, H].  Returns stacked new hiddens [L, B, H]."""
    L, H, Hp, Dp, Kp, _ = dims
    B = x.shape[0]

    # Batch padding / tiling: multiple of 8 sublanes, tile at most 128 rows.
    Bp = _round_up(B, 8)
    if Bp > 128:
        TB = 128
        Bp = _round_up(B, 128)
    else:
        TB = Bp
    nb = Bp // TB

    x_p = jnp.zeros((Bp, Dp), jnp.float32).at[:B, :x.shape[1]].set(
        x.astype(jnp.float32))
    h_p = jnp.zeros((L, Bp, Hp), jnp.float32).at[:, :B, :H].set(
        h_st.astype(jnp.float32))

    out = pl.pallas_call(
        _make_kernel(Dp, Hp),
        out_shape=jax.ShapeDtypeStruct((L, Bp, Hp), jnp.float32),
        grid_spec=pltpu.PrefetchScalarGridSpec(
            num_scalar_prefetch=0,
            grid=(nb, L),
            in_specs=[
                pl.BlockSpec((TB, Dp), lambda b, l: (b, 0)),          # x
                pl.BlockSpec((1, TB, Hp), lambda b, l: (l, b, 0)),    # h0 per layer
                pl.BlockSpec((1, Kp, 4 * Hp), lambda b, l: (l, 0, 0)),  # packed W
                pl.BlockSpec((1, 1, 4 * Hp), lambda b, l: (l, 0, 0)),   # packed b
            ],
            out_specs=pl.BlockSpec((1, TB, Hp), lambda b, l: (l, b, 0)),
            scratch_shapes=[pltpu.VMEM((TB, Kp), jnp.float32)],       # [x | h] carry
        ),
        compiler_params=pltpu.CompilerParams(
            dimension_semantics=("parallel", "arbitrary")),
    )(x_p, h_p, w_all, b_all)

    return out[:, :B, :H]


class RawGRUCellPallas:
    """Stacked GRU cells matching RawGRUCell.forward semantics.

    params: list (one per layer) of dicts with PyTorch-layout tensors:
        weight_ih [3H, in_dim], weight_hh [3H, H], bias_ih [3H], bias_hh [3H].
    All packing/transposition is done once here, not per forward call.
    """

    def __init__(self, params):
        self.layers = len(params)
        H = int(params[0]["weight_hh"].shape[1])
        in_dim0 = int(params[0]["weight_ih"].shape[1])
        Hp = _round_up(H, 128)                       # lane-aligned hidden
        Dp = max(Hp, _round_up(in_dim0, 8))          # input slot width of the carry
        Kp = Dp + Hp
        # TODO(synk): for very large hidden sizes (f32 weight block Kp*4*Hp > ~32 MiB)
        # the 4*Hp output axis would need an extra grid axis / vmem_limit_bytes.
        Ws, bs = [], []
        for p in params:
            W, b = _pack_layer(p["weight_ih"], p["weight_hh"],
                               p["bias_ih"], p["bias_hh"], H, Hp, Dp, Kp)
            Ws.append(W)
            bs.append(b)
        self.w_all = jnp.stack(Ws)                   # [L, Kp, 4*Hp]
        self.b_all = jnp.stack(bs)                   # [L, 1, 4*Hp]
        self.hidden = H
        self.dims = (self.layers, H, Hp, Dp, Kp, in_dim0)

    def __call__(self, x, h=None):
        L, H = self.layers, self.hidden
        x = jnp.asarray(x, jnp.float32)
        B = x.shape[0]
        if h is None:
            h_st = jnp.zeros((L, B, H), jnp.float32)
        else:
            h_st = jnp.stack([jnp.asarray(hi, jnp.float32) for hi in h], axis=0)
        h_all = _stacked_gru_forward(x, h_st, self.w_all, self.b_all, dims=self.dims)
        return h_all[-1], [h_all[i] for i in range(L)]


def _init_params(key, h_dim, hidden_dim, layers):
    """Deterministic init mimicking PyTorch GRU default U(-1/sqrt(H), 1/sqrt(H))."""
    params = []
    bound = 1.0 / jnp.sqrt(jnp.float32(hidden_dim))
    for i in range(layers):
        in_dim = h_dim if i == 0 else hidden_dim
        key, k1, k2, k3, k4 = jax.random.split(key, 5)
        params.append({
            "weight_ih": jax.random.uniform(k1, (3 * hidden_dim, in_dim),
                                            jnp.float32, -bound, bound),
            "weight_hh": jax.random.uniform(k2, (3 * hidden_dim, hidden_dim),
                                            jnp.float32, -bound, bound),
            "bias_ih": jax.random.uniform(k3, (3 * hidden_dim,),
                                          jnp.float32, -bound, bound),
            "bias_hh": jax.random.uniform(k4, (3 * hidden_dim,),
                                          jnp.float32, -bound, bound),
        })
    return params


def _reference_forward(params, x, h=None):
    """Pure-JAX reference of the same stacked GRUCell math (for sanity check)."""
    x = jnp.asarray(x, jnp.float32)
    outs = []
    for i, p in enumerate(params):
        hidden = p["weight_hh"].shape[1]
        h_i = h[i] if h is not None else jnp.zeros((x.shape[0], hidden), jnp.float32)
        gi = x @ p["weight_ih"].T + p["bias_ih"]
        gh = h_i @ p["weight_hh"].T + p["bias_hh"]
        i_r, i_z, i_n = jnp.split(gi, 3, axis=1)
        h_r, h_z, h_n = jnp.split(gh, 3, axis=1)
        r = jax.nn.sigmoid(i_r + h_r)
        z = jax.nn.sigmoid(i_z + h_z)
        n = jnp.tanh(i_n + r * h_n)
        x = (1.0 - z) * n + z * h_i
        outs.append(x)
    return x, outs


if __name__ == "__main__":
    # Shapes match the module defaults: h_dim=10, hidden_dim=50, layers=2.
    batch, h_dim, hidden_dim, layers = 4, 10, 50, 2

    key = jax.random.PRNGKey(0)
    kp, kx, kh = jax.random.split(key, 3)

    params = _init_params(kp, h_dim, hidden_dim, layers)
    x = jax.random.normal(kx, (batch, h_dim), jnp.float32)
    h0 = [jax.random.normal(jax.random.fold_in(kh, i), (batch, hidden_dim), jnp.float32)
          for i in range(layers)]

    model = RawGRUCellPallas(params)

    # Case 1: h provided.  Case 2: h=None (defaults to zeros, as nn.GRUCell does).
    y, h_out = model(x, h0)
    y2, h_out2 = model(x, None)

    jax.block_until_ready(y)
    jax.block_until_ready(y2)
    for h_i in h_out + h_out2:
        jax.block_until_ready(h_i)

    # Sanity check against pure-JAX reference.
    y_ref, h_ref_list = _reference_forward(params, x, h0)
    y2_ref, h2_ref_list = _reference_forward(params, x, None)

    assert jnp.allclose(y, y_ref, atol=1e-5, rtol=1e-5), "mismatch vs reference (h given)"
    for a, b in zip(h_out, h_ref_list):
        assert jnp.allclose(a, b, atol=1e-5, rtol=1e-5), "hidden mismatch (h given)"
    assert jnp.allclose(y2, y2_ref, atol=1e-5, rtol=1e-5), "mismatch vs reference (h=None)"
    for a, b in zip(h_out2, h2_ref_list):
        assert jnp.allclose(a, b, atol=1e-5, rtol=1e-5), "hidden mismatch (h=None)"

    assert y.shape == (batch, hidden_dim) and len(h_out) == layers
    print("KERNEL_OK")
</pallas_src>

<mosaic_0001>
module attributes {stable_mosaic.version = 11 : i64} {
  func.func @kernel(%arg0: i32, %arg1: i32, %arg2: memref<8x128xf32, #tpu.memory_space<vmem>>, %arg3: memref<1x8x128xf32, #tpu.memory_space<vmem>>, %arg4: memref<1x256x512xf32, #tpu.memory_space<vmem>>, %arg5: memref<1x1x512xf32, #tpu.memory_space<vmem>>, %arg6: memref<1x8x128xf32, #tpu.memory_space<vmem>>, %arg7: memref<8x256xf32, #tpu.memory_space<vmem>>) attributes {dimension_semantics = [#tpu.dimension_semantics<parallel>, #tpu.dimension_semantics<arbitrary>], iteration_bounds = array<i64: 1, 2>, scalar_prefetch = 0 : i64, scratch_operands = 1 : i64, tpu.core_type = #tpu.core_type<tc>, window_params = [{transform_indices = @transform_0, window_bounds = array<i64: 8, 128>}, {transform_indices = @transform_1, window_bounds = array<i64: 1, 8, 128>}, {transform_indices = @transform_2, window_bounds = array<i64: 1, 256, 512>}, {transform_indices = @transform_3, window_bounds = array<i64: 1, 1, 512>}, {transform_indices = @transform_4, window_bounds = array<i64: 1, 8, 128>}]} {
    %c0_i32 = arith.constant 0 : i32
    %0 = arith.cmpi eq, %arg1, %c0_i32 : i32
    %1 = arith.extui %0 : i1 to i32
    %c0_i32_0 = arith.constant 0 : i32
    %2 = arith.cmpi ne, %1, %c0_i32_0 : i32
    scf.if %2 {
      %c0_20 = arith.constant 0 : index
      %c0_21 = arith.constant 0 : index
      %40 = vector.load %arg2[%c0_20, %c0_21] : memref<8x128xf32, #tpu.memory_space<vmem>>, vector<8x128xf32>
      %c0_22 = arith.constant 0 : index
      %c0_23 = arith.constant 0 : index
      %41 = vector.load %arg7[%c0_22, %c0_23] : memref<8x256xf32, #tpu.memory_space<vmem>>, vector<8x128xf32>
      tpu.vector_store %arg7[%c0_22, %c0_23], %40 {strides = array<i32>} : memref<8x256xf32, #tpu.memory_space<vmem>>, vector<8x128xf32>,
    } else {
    }
    %c0 = arith.constant 0 : index
    %c0_1 = arith.constant 0 : index
    %c0_2 = arith.constant 0 : index
    %3 = vector.load %arg3[%c0, %c0_1, %c0_2] : memref<1x8x128xf32, #tpu.memory_space<vmem>>, vector<1x8x128xf32>
    %4 = vector.shape_cast %3 : vector<1x8x128xf32> to vector<8x128xf32>
    %c0_3 = arith.constant 0 : index
    %c128 = arith.constant 128 : index
    %5 = vector.load %arg7[%c0_3, %c128] : memref<8x256xf32, #tpu.memory_space<vmem>>, vector<8x128xf32>
    tpu.vector_store %arg7[%c0_3, %c128], %4 {strides = array<i32>} : memref<8x256xf32, #tpu.memory_space<vmem>>, vector<8x128xf32>,
    %c0_4 = arith.constant 0 : index
    %c0_5 = arith.constant 0 : index
    %6 = vector.load %arg7[%c0_4, %c0_5] : memref<8x256xf32, #tpu.memory_space<vmem>>, vector<8x256xf32>
    %c0_6 = arith.constant 0 : index
    %c0_7 = arith.constant 0 : index
    %c0_8 = arith.constant 0 : index
    %7 = vector.load %arg4[%c0_6, %c0_7, %c0_8] : memref<1x256x512xf32, #tpu.memory_space<vmem>>, vector<1x256x512xf32>
    %8 = vector.shape_cast %7 : vector<1x256x512xf32> to vector<256x512xf32>
    %cst = arith.constant dense<0.000000e+00> : vector<8x512xf32>
    %9 = tpu.matmul %6, %8, %cst {dimension_numbers = #tpu.dot_dimension_numbers<[1], [0], [0], [1], [0, 0, 1, 1], [], []>} : vector<8x256xf32>, vector<256x512xf32>, vector<8x512xf32> -> vector<8x512xf32>
    %c0_9 = arith.constant 0 : index
    %c0_10 = arith.constant 0 : index
    %c0_11 = arith.constant 0 : index
    %10 = vector.load %arg5[%c0_9, %c0_10, %c0_11] : memref<1x1x512xf32, #tpu.memory_space<vmem>>, vector<1x1x512xf32>
    %11 = vector.shape_cast %10 : vector<1x1x512xf32> to vector<1x512xf32>
    %12 = vector.broadcast %11 : vector<1x512xf32> to vector<8x512xf32>
    %13 = arith.addf %9, %12 : vector<8x512xf32>
    %14 = vector.extract_strided_slice %13 {offsets = [0, 0], sizes = [8, 128], strides = [1, 1]} : vector<8x512xf32> to vector<8x128xf32>
    %15 = arith.negf %14 : vector<8x128xf32>
    %16 = math.exp %15 : vector<8x128xf32>
    %cst_12 = arith.constant 1.000000e+00 : f32
    %17 = vector.broadcast %cst_12 : f32 to vector<8x128xf32>
    %18 = arith.addf %17, %16 : vector<8x128xf32>
    %19 = arith.divf %17, %18 : vector<8x128xf32>
    %20 = vector.extract_strided_slice %13 {offsets = [0, 128], sizes = [8, 128], strides = [1, 1]} : vector<8x512xf32> to vector<8x128xf32>
    %21 = arith.negf %20 : vector<8x128xf32>
    %22 = math.exp %21 : vector<8x128xf32>
    %cst_13 = arith.constant 1.000000e+00 : f32
    %23 = vector.broadcast %cst_13 : f32 to vector<8x128xf32>
    %24 = arith.addf %23, %22 : vector<8x128xf32>
    %25 = arith.divf %23, %24 : vector<8x128xf32>
    %26 = vector.extract_strided_slice %13 {offsets = [0, 256], sizes = [8, 128], strides = [1, 1]} : vector<8x512xf32> to vector<8x128xf32>
    %27 = vector.extract_strided_slice %13 {offsets = [0, 384], sizes = [8, 128], strides = [1, 1]} : vector<8x512xf32> to vector<8x128xf32>
    %28 = arith.mulf %19, %27 : vector<8x128xf32>
    %29 = arith.addf %26, %28 : vector<8x128xf32>
    %30 = math.tanh %29 : vector<8x128xf32>
    %cst_14 = arith.constant 1.000000e+00 : f32
    %31 = vector.broadcast %cst_14 : f32 to vector<8x128xf32>
    %32 = arith.subf %31, %25 : vector<8x128xf32>
    %33 = arith.mulf %32, %30 : vector<8x128xf32>
    %34 = arith.mulf %25, %4 : vector<8x128xf32>
    %35 = arith.addf %33, %34 : vector<8x128xf32>
    %c0_15 = arith.constant 0 : index
    %c0_16 = arith.constant 0 : index
    %c0_17 = arith.constant 0 : index
    %36 = vector.load %arg6[%c0_15, %c0_16, %c0_17] : memref<1x8x128xf32, #tpu.memory_space<vmem>>, vector<1x8x128xf32>
    %37 = vector.shape_cast %36 : vector<1x8x128xf32> to vector<8x128xf32>
    %38 = vector.shape_cast %35 : vector<8x128xf32> to vector<1x8x128xf32>
    tpu.vector_store %arg6[%c0_15, %c0_16, %c0_17], %38 {strides = array<i32>} : memref<1x8x128xf32, #tpu.memory_space<vmem>>, vector<1x8x128xf32>,
    %c0_18 = arith.constant 0 : index
    %c0_19 = arith.constant 0 : index
    %39 = vector.load %arg7[%c0_18, %c0_19] : memref<8x256xf32, #tpu.memory_space<vmem>>, vector<8x128xf32>
    tpu.vector_store %arg7[%c0_18, %c0_19], %35 {strides = array<i32>} : memref<8x256xf32, #tpu.memory_space<vmem>>, vector<8x128xf32>,
    return
  }
  func.func @transform_0(%arg0: i32, %arg1: i32) -> (i32, i32) {
    %c0_i32 = arith.constant 0 : i32
    %c0_i32_0 = arith.constant 0 : i32
    return %arg0, %c0_i32 : i32, i32
  }
  func.func @transform_1(%arg0: i32, %arg1: i32) -> (i32, i32, i32) {
    %c0_i32 = arith.constant 0 : i32
    %c0_i32_0 = arith.constant 0 : i32
    return %arg1, %arg0, %c0_i32 : i32, i32, i32
  }
  func.func @transform_2(%arg0: i32, %arg1: i32) -> (i32, i32, i32) {
    %c0_i32 = arith.constant 0 : i32
    %c0_i32_0 = arith.constant 0 : i32
    %c0_i32_1 = arith.constant 0 : i32
    return %arg1, %c0_i32, %c0_i32_0 : i32, i32, i32
  }
  func.func @transform_3(%arg0: i32, %arg1: i32) -> (i32, i32, i32) {
    %c0_i32 = arith.constant 0 : i32
    %c0_i32_0 = arith.constant 0 : i32
    %c0_i32_1 = arith.constant 0 : i32
    return %arg1, %c0_i32, %c0_i32_0 : i32, i32, i32
  }
  func.func @transform_4(%arg0: i32, %arg1: i32) -> (i32, i32, i32) {
    %c0_i32 = arith.constant 0 : i32
    %c0_i32_0 = arith.constant 0 : i32
    return %arg1, %arg0, %c0_i32 : i32, i32, i32
  }
}

</mosaic_0001>

<llo_original>
// kernel: _stacked_gru_forward.1
$region0: #{_stacked_gru_forward.1}
  #allocation0 [shape = 'u32[]', space=smem, size = 0x4, offset = 0x4, fixed_abs, tag = 'smem constant byte address 0x4 - core index']
  #allocation1 [shape = 'u32[144,128]{1,0:T(1,128)}', space=vmem, size = 0x12000, scoped, tag = 'internal scratch']
  #allocation2 [shape = 'f32[8,256]{1,0:T(8,128)}', space=vmem, size = 0x2000, scoped, tag = 'scratch operand']
  %s0 = inlined_call_operand.vmem [shape: f32[8,128], index: 0, kind: input, shape index: {}]
  %s1 = inlined_call_operand.vmem [shape: f32[2,8,128], index: 1, kind: input, shape index: {}]
  %s2 = inlined_call_operand.hbm [shape: f32[2,256,512], index: 2, kind: input, shape index: {}]
  %s3 = inlined_call_operand.vmem [shape: f32[2,1,512], index: 3, kind: input, shape index: {}]
  %s4 = inlined_call_operand.vmem [shape: f32[2,8,128], index: 4, kind: output, shape index: {}]
  %s5 = sld [smem:[#allocation0]]
  $region57: #{_stacked_gru_forward.1} parent=0
    _
  %s7 = ssub.s32 1, %s5
  %s8 = scalar_select 0, %s7, %s5
  $region1: #{_stacked_gru_forward.1} parent=0
    #allocation3 [shape = 'u8[1048576]{0}', space=vmem, size = 0x100000, scoped, tag = 'input window, operand 2']
    #allocation4 [shape = 's32[2]{0}', space=sflag, size = 0x8, scoped, tag = 'scoped memory for _stacked_gru_forward.1']
    %9 = vsyncpa [#allocation4], 0
    %s10 = scalar_lea.sflag [#allocation4], 1
    %11 = vsyncpa %s10, 0
    loop: start=0, step=1, limit=4
    $region2: #{_stacked_gru_forward.1} parent=1 // loop_pre_header
      _
    $region3: #{_stacked_gru_forward.1} parent=1 // loop_header
      %s13 = sphi 0, %s17
      %p14 = scmp.ge.s32.totalorder %s13, 4
      %s20 = sphi 0, %s32
      %s21 = sphi 0, %s28
      %s22 = sphi 0, %s20
      %s23 = sphi 0, %s21
      %s24 = sphi 0, %s22
      %s25 = sphi 0, %s23
      %s35 = sphi 0, %s37
      %s38 = sphi 0, %s35
      %s39 = sphi 0, %s38
      %s55 = sphi 0, %s39
      %s63 = sphi 0, %s65
      %s66 = sphi 0, %s63
      %s67 = sphi 0, %s66
      %s83 = sphi 0, %s67
      %s89 = sphi 0, %s91
      %s92 = sphi 0, %s89
      %s93 = sphi 0, %s92
      %s109 = sphi 0, %s93
      %s115 = sphi 0, %s117
      %s118 = sphi 0, %s115
      %s119 = sphi 0, %s118
      %s135 = sphi 0, %s119
      %s143 = sphi 0, %s145
      %s146 = sphi 0, %s143
      %s147 = sphi 0, %s146
      %s163 = sphi 0, %s147
    $region4: #{_stacked_gru_forward.1} parent=1 // loop_header_branch
      %16 = sbr.rel (%p14) target = $region8
    $region5: #{_stacked_gru_forward.1} parent=1 // loop_body
      %s18 = ssub.s32 %s13, 1
      %s19 = ssub.s32 %s13, 2
      %s26 = sadd.s32 1, %s21
      %p27 = scmp.ge.s32.totalorder %s26, 2
      %s28 = scalar_select %p27, 0, %s26
      %s29 = sadd.s32 1, %s20
      %s30 = scalar_select %p27, %s29, %s20
      %p31 = scmp.ge.s32.totalorder %s30, 1
      %s32 = scalar_select %p31, 0, %s30
      %s33 = ssub.s32 %s20, %s32
      %p34 = scmp.eq.s32.totalorder %s33, 0
      %s36 = sadd.s32 %s35, 1
      %s37 = scalar_select %p34, %s35, %s36
      %p40 = pneg %p34
      %p41 = scmp.eq.s32.totalorder %s13, 1
      %p42 = por %p40, %p41
      %p43 = scmp.ne.s32.totalorder %s35, %s38
      %p44 = scmp.eq.s32.totalorder %s13, 0
      %p45 = por %p43, %p44
      %p46 = scmp.ne.s32.totalorder %s35, %s38
      %p47 = scmp.eq.s32.totalorder %s18, 1
      %p48 = por %p46, %p47
      %p49 = scmp.ne.s32.totalorder %s38, %s39
      %p50 = scmp.eq.s32.totalorder %s18, 0
      %p51 = por %p49, %p50
      %p52 = scmp.ne.s32.totalorder %s38, %s39
      %p53 = scmp.eq.s32.totalorder %s19, 1
      %p54 = por %p52, %p53
      %p56 = scmp.ne.s32.totalorder %s39, %s55
      %p57 = scmp.eq.s32.totalorder %s19, 0
      %p58 = por %p56, %p57
      %s59 = ssub.s32 %s21, %s28
      %s60 = ssub.s32 %s20, %s32
      %s61 = sor.u32 %s59, %s60
      %p62 = scmp.eq.s32.totalorder %s61, 0
      %s64 = sadd.s32 %s63, 1
      %s65 = scalar_select %p62, %s63, %s64
      %p68 = pneg %p62
      %p69 = scmp.eq.s32.totalorder %s13, 1
      %p70 = por %p68, %p69
      %p71 = scmp.ne.s32.totalorder %s63, %s66
      %p72 = scmp.eq.s32.totalorder %s13, 0
      %p73 = por %p71, %p72
      %p74 = scmp.ne.s32.totalorder %s63, %s66
      %p75 = scmp.eq.s32.totalorder %s18, 1
      %p76 = por %p74, %p75
      %p77 = scmp.ne.s32.totalorder %s66, %s67
      %p78 = scmp.eq.s32.totalorder %s18, 0
      %p79 = por %p77, %p78
      %p80 = scmp.ne.s32.totalorder %s66, %s67
      %p81 = scmp.eq.s32.totalorder %s19, 1
      %p82 = por %p80, %p81
      %p84 = scmp.ne.s32.totalorder %s67, %s83
      %p85 = scmp.eq.s32.totalorder %s19, 0
      %p86 = por %p84, %p85
      %s87 = ssub.s32 %s21, %s28
      %p88 = scmp.eq.s32.totalorder %s87, 0
      %s90 = sadd.s32 %s89, 1
      %s91 = scalar_select %p88, %s89, %s90
      %p94 = pneg %p88
      %p95 = scmp.eq.s32.totalorder %s13, 1
      %p96 = por %p94, %p95
      %p97 = scmp.ne.s32.totalorder %s89, %s92
      %p98 = scmp.eq.s32.totalorder %s13, 0
      %p99 = por %p97, %p98
      %p100 = scmp.ne.s32.totalorder %s89, %s92
      %p101 = scmp.eq.s32.totalorder %s18, 1
      %p102 = por %p100, %p101
      %p103 = scmp.ne.s32.totalorder %s92, %s93
      %p104 = scmp.eq.s32.totalorder %s18, 0
      %p105 = por %p103, %p104
      %p106 = scmp.ne.s32.totalorder %s92, %s93
      %p107 = scmp.eq.s32.totalorder %s19, 1
      %p108 = por %p106, %p107
      %p110 = scmp.ne.s32.totalorder %s93, %s109
      %p111 = scmp.eq.s32.totalorder %s19, 0
      %p112 = por %p110, %p111
      %s113 = ssub.s32 %s21, %s28
      %p114 = scmp.eq.s32.totalorder %s113, 0
      %s116 = sadd.s32 %s115, 1
      %s117 = scalar_select %p114, %s115, %s116
      %p120 = pneg %p114
      %p121 = scmp.eq.s32.totalorder %s13, 1
      %p122 = por %p120, %p121
      %p123 = scmp.ne.s32.totalorder %s115, %s118
      %p124 = scmp.eq.s32.totalorder %s13, 0
      %p125 = por %p123, %p124
      %p126 = scmp.ne.s32.totalorder %s115, %s118
      %p127 = scmp.eq.s32.totalorder %s18, 1
      %p128 = por %p126, %p127
      %p129 = scmp.ne.s32.totalorder %s118, %s119
      %p130 = scmp.eq.s32.totalorder %s18, 0
      %p131 = por %p129, %p130
      %p132 = scmp.ne.s32.totalorder %s118, %s119
      %p133 = scmp.eq.s32.totalorder %s19, 1
      %p134 = por %p132, %p133
      %p136 = scmp.ne.s32.totalorder %s119, %s135
      %p137 = scmp.eq.s32.totalorder %s19, 0
      %p138 = por %p136, %p137
      %s139 = ssub.s32 %s21, %s28
      %s140 = ssub.s32 %s20, %s32
      %s141 = sor.u32 %s139, %s140
      %p142 = scmp.eq.s32.totalorder %s141, 0
      %s144 = sadd.s32 %s143, 1
      %s145 = scalar_select %p142, %s143, %s144
      %p148 = pneg %p142
      %p149 = scmp.eq.s32.totalorder %s13, 1
      %p150 = por %p148, %p149
      %p151 = scmp.ne.s32.totalorder %s143, %s146
      %p152 = scmp.eq.s32.totalorder %s13, 0
      %p153 = por %p151, %p152
      %p154 = scmp.ne.s32.totalorder %s143, %s146
      %p155 = scmp.eq.s32.totalorder %s18, 1
      %p156 = por %p154, %p155
      %p157 = scmp.ne.s32.totalorder %s146, %s147
      %p158 = scmp.eq.s32.totalorder %s18, 0
      %p159 = por %p157, %p158
      %p160 = scmp.ne.s32.totalorder %s146, %s147
      %p161 = scmp.eq.s32.totalorder %s19, 1
      %p162 = por %p160, %p161
      %p164 = scmp.ne.s32.totalorder %s147, %s163
      %p165 = scmp.eq.s32.totalorder %s19, 0
      %p166 = por %p164, %p165
      %p167 = scmp.le.s32.totalorder 1, %s13
      %p168 = scmp.lt.s32.totalorder %s13, 3
      %p169 = pnand %p167, %p168
      %p170 = pneg %p169
      // Predicated region
      $region9: #{_stacked_gru_forward.1} parent=5 // pred_check
        _
      $region10: #{_stacked_gru_forward.1} parent=5 // pred_check_branch
        %172 = sbr.rel (%p169) target = $region12
      $region11: #{_stacked_gru_forward.1} parent=5 // pred_region
        %s173 = ssub.s32 %s13, 1
        // Predicated region
        $region13: #{_stacked_gru_forward.1} parent=11 // pred_check
          %p174 = pneg %p51
        $region14: #{_stacked_gru_forward.1} parent=11 // pred_check_branch
          %176 = sbr.rel (%p174) target = $region16
        $region15: #{_stacked_gru_forward.1} parent=11 // pred_region
          %p177 = scmp.lt.s32.totalorder %s22, 0
          %s178 = scalar_select %p177, %s22, 0
          %s179 = smul.addr %s178, 8
          %s180 = scalar_lea.vmem %s0, %s179
        $region16: #{_stacked_gru_forward.1} parent=11 // pred_fallthru
          _
      $region12: #{_stacked_gru_forward.1} parent=5 // pred_fallthru
        _
      %p181 = scmp.lt.s32.totalorder %s13, 2
      // Predicated region
      $region17: #{_stacked_gru_forward.1} parent=5 // pred_check
        %p182 = pneg %p181
      $region18: #{_stacked_gru_forward.1} parent=5 // pred_check_branch
        %184 = sbr.rel (%p182) target = $region20
      $region19: #{_stacked_gru_forward.1} parent=5 // pred_region
        // Predicated region
        $region21: #{_stacked_gru_forward.1} parent=19 // pred_check
          %p185 = pneg %p73
        $region22: #{_stacked_gru_forward.1} parent=19 // pred_check_branch
          %187 = sbr.rel (%p185) target = $region24
        $region23: #{_stacked_gru_forward.1} parent=19 // pred_region
          %p188 = scmp.lt.s32.totalorder %s21, 1
          %s189 = scalar_select %p188, %s21, 1
          %p190 = scmp.lt.s32.totalorder %s20, 0
          %s191 = scalar_select %p190, %s20, 0
          %s192 = sadd.s32 %s191, %s189
          %s193 = smul.addr %s192, 8
          %s194 = scalar_lea.vmem %s1, %s193
        $region24: #{_stacked_gru_forward.1} parent=19 // pred_fallthru
          _
        // Predicated region
        $region25: #{_stacked_gru_forward.1} parent=19 // pred_check
          %p195 = pneg %p99
        $region26: #{_stacked_gru_forward.1} parent=19 // pred_check_branch
          %197 = sbr.rel (%p195) target = $region28
        $region27: #{_stacked_gru_forward.1} parent=19 // pred_region
          %s198 = sand.u32 %s89, 1
          %s199 = scalar_lea.sflag [#allocation4], %s198
          %s200 = sand.u32 %s89, 1
          %s201 = smul.addr %s200, 1024
          %s202 = scalar_lea.vmem [#allocation3], %s201
          %s204 = ssub.s32 16384, 16384
          %205 = vsyncadd %s199, %s204
          %s206 = smul.addr %s21, 128
          %s207 = smul.addr %s206, 128
          %s208 = scalar_lea.hbm %s2, %s207
          %s209 = sshll.u32 %s202, 4
          %s210 = int_to_ptr.vmem [resolvable:$true] %s209
          %215 = dma.hbm_to_vmem [thread:$0]  %s208, 16384, %s210, %s199, 512, 512, 32
        $region28: #{_stacked_gru_forward.1} parent=19 // pred_fallthru
          _
        // Predicated region
        $region29: #{_stacked_gru_forward.1} parent=19 // pred_check
          %p216 = pneg %p125
        $region30: #{_stacked_gru_forward.1} parent=19 // pred_check_branch
          %218 = sbr.rel (%p216) target = $region32
        $region31: #{_stacked_gru_forward.1} parent=19 // pred_region
          %p219 = scmp.lt.s32.totalorder %s21, 1
          %s220 = scalar_select %p219, %s21, 1
          %s221 = smul.addr %s220, 4
          %s222 = scalar_lea.vmem %s3, %s221
        $region32: #{_stacked_gru_forward.1} parent=19 // pred_fallthru
          _
      $region20: #{_stacked_gru_forward.1} parent=5 // pred_fallthru
        _
      %p223 = scmp.le.s32.totalorder 1, %s13
      %p224 = scmp.lt.s32.totalorder %s13, 3
      %p225 = pnand %p223, %p224
      %p226 = pneg %p225
      // Predicated region
      $region33: #{_stacked_gru_forward.1} parent=5 // pred_check
        _
      $region34: #{_stacked_gru_forward.1} parent=5 // pred_check_branch
        %228 = sbr.rel (%p225) target = $region36
      $region35: #{_stacked_gru_forward.1} parent=5 // pred_region
        %s229 = ssub.s32 %s13, 1
        %s230 = sand.u32 %s92, 1
        %s231 = scalar_lea.sflag [#allocation4], %s230
        %s232 = sand.u32 %s92, 1
        %s233 = smul.addr %s232, 1024
        %s234 = scalar_lea.vmem [#allocation3], %s233
        // Predicated region
        $region37: #{_stacked_gru_forward.1} parent=35 // pred_check
          %p235 = pneg %p105
        $region38: #{_stacked_gru_forward.1} parent=35 // pred_check_branch
          %237 = sbr.rel (%p235) target = $region40
        $region39: #{_stacked_gru_forward.1} parent=35 // pred_region
          %238 = dma.done %s231, 16384
        $region40: #{_stacked_gru_forward.1} parent=35 // pred_fallthru
          _
        %p239 = scmp.lt.s32.totalorder %s22, 0
        %s240 = scalar_select %p239, %s22, 0
        %s241 = smul.addr %s240, 8
        %s242 = scalar_lea.vmem %s0, %s241
        %p243 = pneg %p51
        %p244 = pneg %p48
        %p245 = scmp.lt.s32.totalorder %s23, 1
        %s246 = scalar_select %p245, %s23, 1
        %p247 = scmp.lt.s32.totalorder %s22, 0
        %s248 = scalar_select %p247, %s22, 0
        %s249 = sadd.s32 %s248, %s246
        %s250 = smul.addr %s249, 8
        %s251 = scalar_lea.vmem %s1, %s250
        %p252 = pneg %p79
        %p253 = pneg %p76
        %s254 = sand.u32 %s92, 1
        %s255 = scalar_lea.sflag [#allocation4], %s254
        %s256 = sand.u32 %s92, 1
        %s257 = smul.addr %s256, 1024
        %s258 = scalar_lea.vmem [#allocation3], %s257
        %p259 = pneg %p105
        %p260 = pneg %p102
        %p261 = scmp.lt.s32.totalorder %s23, 1
        %s262 = scalar_select %p261, %s23, 1
        %s263 = smul.addr %s262, 4
        %s264 = scalar_lea.vmem %s3, %s263
        %p265 = pneg %p131
        %p266 = pneg %p128
        %p267 = pneg %p159
        %p268 = pneg %p156
        %p269 = scmp.lt.s32.totalorder %s23, 1
        %s270 = scalar_select %p269, %s23, 1
        %p271 = scmp.lt.s32.totalorder %s22, 0
        %s272 = scalar_select %p271, %s22, 0
        %s273 = sadd.s32 %s272, %s270
        %s274 = smul.addr %s273, 8
        %s275 = scalar_lea.vmem %s4, %s274
        %p276 = scmp.lt.s32.totalorder %s22, 0
        %s277 = scalar_select %p276, %s22, 0
        %s278 = smul.addr %s277, 8
        %s279 = scalar_lea.vmem %s0, %s278
        %p280 = scmp.lt.s32.totalorder %s23, 1
        %s281 = scalar_select %p280, %s23, 1
        %p282 = scmp.lt.s32.totalorder %s22, 0
        %s283 = scalar_select %p282, %s22, 0
        %s284 = sadd.s32 %s283, %s281
        %s285 = smul.addr %s284, 8
        %s286 = scalar_lea.vmem %s1, %s285
        %p287 = scmp.lt.s32.totalorder %s23, 1
        %s288 = scalar_select %p287, %s23, 1
        %s289 = smul.addr %s288, 4
        %s290 = scalar_lea.vmem %s3, %s289
        %p291 = scmp.lt.s32.totalorder %s23, 1
        %s292 = scalar_select %p291, %s23, 1
        %p293 = scmp.lt.s32.totalorder %s22, 0
        %s294 = scalar_select %p293, %s22, 0
        %s295 = sadd.s32 %s294, %s292
        %s296 = smul.addr %s295, 8
        %s297 = scalar_lea.vmem %s4, %s296
        %p298 = scmp.eq.s32.totalorder %s23, 0
        // Predicated region
        $region41: #{_stacked_gru_forward.1} parent=35 // pred_check
          %p299 = pneg %p298
        $region42: #{_stacked_gru_forward.1} parent=35 // pred_check_branch
          %301 = sbr.rel (%p299) target = $region44
        $region43: #{_stacked_gru_forward.1} parent=35 // pred_region
          %v302 = vld [vmem:[%s279] sm:$0xff]
          %303 = vst [vmem:[#allocation2] sm:$0xff] %v302
        $region44: #{_stacked_gru_forward.1} parent=35 // pred_fallthru
          _
        %v304 = vld [vmem:[%s286] sm:$0xff]
        %305 = vst [vmem:[#allocation2 + $0x8] sm:$0xff] %v304
        %v306 = vld [vmem:[#allocation2] sm:$0xff]
        %v307 = vld [vmem:[#allocation2 + $0x8] sm:$0xff]
        %v308 = vld [vmem:[%s234] sm:$0xff]
        %v309 = vld [vmem:[%s234 + $0x8] sm:$0xff]
        %v310 = vld [vmem:[%s234 + $0x10] sm:$0xff]
        %v311 = vld [vmem:[%s234 + $0x18] sm:$0xff]
        %v312 = vld [vmem:[%s234 + $0x20] sm:$0xff]
        %v313 = vld [vmem:[%s234 + $0x28] sm:$0xff]
        %v314 = vld [vmem:[%s234 + $0x30] sm:$0xff]
        %v315 = vld [vmem:[%s234 + $0x38] sm:$0xff]
        %v316 = vld [vmem:[%s234 + $0x40] sm:$0xff]
        %v317 = vld [vmem:[%s234 + $0x48] sm:$0xff]
        %v318 = vld [vmem:[%s234 + $0x50] sm:$0xff]
        %v319 = vld [vmem:[%s234 + $0x58] sm:$0xff]
        %v320 = vld [vmem:[%s234 + $0x60] sm:$0xff]
        %v321 = vld [vmem:[%s234 + $0x68] sm:$0xff]
        %v322 = vld [vmem:[%s234 + $0x70] sm:$0xff]
        %v323 = vld [vmem:[%s234 + $0x78] sm:$0xff]
        %v324 = vld [vmem:[%s234 + $0x80] sm:$0xff]
        %v325 = vld [vmem:[%s234 + $0x88] sm:$0xff]
        %v326 = vld [vmem:[%s234 + $0x90] sm:$0xff]
        %v327 = vld [vmem:[%s234 + $0x98] sm:$0xff]
        %v328 = vld [vmem:[%s234 + $0xa0] sm:$0xff]
        %v329 = vld [vmem:[%s234 + $0xa8] sm:$0xff]
        %v330 = vld [vmem:[%s234 + $0xb0] sm:$0xff]
        %v331 = vld [vmem:[%s234 + $0xb8] sm:$0xff]
        %v332 = vld [vmem:[%s234 + $0xc0] sm:$0xff]
        %v333 = vld [vmem:[%s234 + $0xc8] sm:$0xff]
        %v334 = vld [vmem:[%s234 + $0xd0] sm:$0xff]
        %v335 = vld [vmem:[%s234 + $0xd8] sm:$0xff]
        %v336 = vld [vmem:[%s234 + $0xe0] sm:$0xff]
        %v337 = vld [vmem:[%s234 + $0xe8] sm:$0xff]
        %v338 = vld [vmem:[%s234 + $0xf0] sm:$0xff]
        %v339 = vld [vmem:[%s234 + $0xf8] sm:$0xff]
        %v340 = vld [vmem:[%s234 + $0x100] sm:$0xff]
        %v341 = vld [vmem:[%s234 + $0x108] sm:$0xff]
        %v342 = vld [vmem:[%s234 + $0x110] sm:$0xff]
        %v343 = vld [vmem:[%s234 + $0x118] sm:$0xff]
        %v344 = vld [vmem:[%s234 + $0x120] sm:$0xff]
        %v345 = vld [vmem:[%s234 + $0x128] sm:$0xff]
        %v346 = vld [vmem:[%s234 + $0x130] sm:$0xff]
        %v347 = vld [vmem:[%s234 + $0x138] sm:$0xff]
        %v348 = vld [vmem:[%s234 + $0x140] sm:$0xff]
        %v349 = vld [vmem:[%s234 + $0x148] sm:$0xff]
        %v350 = vld [vmem:[%s234 + $0x150] sm:$0xff]
        %v351 = vld [vmem:[%s234 + $0x158] sm:$0xff]
        %v352 = vld [vmem:[%s234 + $0x160] sm:$0xff]
        %v353 = vld [vmem:[%s234 + $0x168] sm:$0xff]
        %v354 = vld [vmem:[%s234 + $0x170] sm:$0xff]
        %v355 = vld [vmem:[%s234 + $0x178] sm:$0xff]
        %v356 = vld [vmem:[%s234 + $0x180] sm:$0xff]
        %v357 = vld [vmem:[%s234 + $0x188] sm:$0xff]
        %v358 = vld [vmem:[%s234 + $0x190] sm:$0xff]
        %v359 = vld [vmem:[%s234 + $0x198] sm:$0xff]
        %v360 = vld [vmem:[%s234 + $0x1a0] sm:$0xff]
        %v361 = vld [vmem:[%s234 + $0x1a8] sm:$0xff]
        %v362 = vld [vmem:[%s234 + $0x1b0] sm:$0xff]
        %v363 = vld [vmem:[%s234 + $0x1b8] sm:$0xff]
        %v364 = vld [vmem:[%s234 + $0x1c0] sm:$0xff]
        %v365 = vld [vmem:[%s234 + $0x1c8] sm:$0xff]
        %v366 = vld [vmem:[%s234 + $0x1d0] sm:$0xff]
        %v367 = vld [vmem:[%s234 + $0x1d8] sm:$0xff]
        %v368 = vld [vmem:[%s234 + $0x1e0] sm:$0xff]
        %v369 = vld [vmem:[%s234 + $0x1e8] sm:$0xff]
        %v370 = vld [vmem:[%s234 + $0x1f0] sm:$0xff]
        %v371 = vld [vmem:[%s234 + $0x1f8] sm:$0xff]
        %v372 = vld [vmem:[%s234 + $0x200] sm:$0xff]
        %v373 = vld [vmem:[%s234 + $0x208] sm:$0xff]
        %v374 = vld [vmem:[%s234 + $0x210] sm:$0xff]
        %v375 = vld [vmem:[%s234 + $0x218] sm:$0xff]
        %v376 = vld [vmem:[%s234 + $0x220] sm:$0xff]
        %v377 = vld [vmem:[%s234 + $0x228] sm:$0xff]
        %v378 = vld [vmem:[%s234 + $0x230] sm:$0xff]
        %v379 = vld [vmem:[%s234 + $0x238] sm:$0xff]
        %v380 = vld [vmem:[%s234 + $0x240] sm:$0xff]
        %v381 = vld [vmem:[%s234 + $0x248] sm:$0xff]
        %v382 = vld [vmem:[%s234 + $0x250] sm:$0xff]
        %v383 = vld [vmem:[%s234 + $0x258] sm:$0xff]
        %v384 = vld [vmem:[%s234 + $0x260] sm:$0xff]
        %v385 = vld [vmem:[%s234 + $0x268] sm:$0xff]
        %v386 = vld [vmem:[%s234 + $0x270] sm:$0xff]
        %v387 = vld [vmem:[%s234 + $0x278] sm:$0xff]
        %v388 = vld [vmem:[%s234 + $0x280] sm:$0xff]
        %v389 = vld [vmem:[%s234 + $0x288] sm:$0xff]
        %v390 = vld [vmem:[%s234 + $0x290] sm:$0xff]
        %v391 = vld [vmem:[%s234 + $0x298] sm:$0xff]
        %v392 = vld [vmem:[%s234 + $0x2a0] sm:$0xff]
        %v393 = vld [vmem:[%s234 + $0x2a8] sm:$0xff]
        %v394 = vld [vmem:[%s234 + $0x2b0] sm:$0xff]
        %v395 = vld [vmem:[%s234 + $0x2b8] sm:$0xff]
        %v396 = vld [vmem:[%s234 + $0x2c0] sm:$0xff]
        %v397 = vld [vmem:[%s234 + $0x2c8] sm:$0xff]
        %v398 = vld [vmem:[%s234 + $0x2d0] sm:$0xff]
        %v399 = vld [vmem:[%s234 + $0x2d8] sm:$0xff]
        %v400 = vld [vmem:[%s234 + $0x2e0] sm:$0xff]
        %v401 = vld [vmem:[%s234 + $0x2e8] sm:$0xff]
        %v402 = vld [vmem:[%s234 + $0x2f0] sm:$0xff]
        %v403 = vld [vmem:[%s234 + $0x2f8] sm:$0xff]
        %v404 = vld [vmem:[%s234 + $0x300] sm:$0xff]
        %v405 = vld [vmem:[%s234 + $0x308] sm:$0xff]
        %v406 = vld [vmem:[%s234 + $0x310] sm:$0xff]
        %v407 = vld [vmem:[%s234 + $0x318] sm:$0xff]
        %v408 = vld [vmem:[%s234 + $0x320] sm:$0xff]
        %v409 = vld [vmem:[%s234 + $0x328] sm:$0xff]
        %v410 = vld [vmem:[%s234 + $0x330] sm:$0xff]
        %v411 = vld [vmem:[%s234 + $0x338] sm:$0xff]
        %v412 = vld [vmem:[%s234 + $0x340] sm:$0xff]
        %v413 = vld [vmem:[%s234 + $0x348] sm:$0xff]
        %v414 = vld [vmem:[%s234 + $0x350] sm:$0xff]
        %v415 = vld [vmem:[%s234 + $0x358] sm:$0xff]
        %v416 = vld [vmem:[%s234 + $0x360] sm:$0xff]
        %v417 = vld [vmem:[%s234 + $0x368] sm:$0xff]
        %v418 = vld [vmem:[%s234 + $0x370] sm:$0xff]
        %v419 = vld [vmem:[%s234 + $0x378] sm:$0xff]
        %v420 = vld [vmem:[%s234 + $0x380] sm:$0xff]
        %v421 = vld [vmem:[%s234 + $0x388] sm:$0xff]
        %v422 = vld [vmem:[%s234 + $0x390] sm:$0xff]
        %v423 = vld [vmem:[%s234 + $0x398] sm:$0xff]
        %v424 = vld [vmem:[%s234 + $0x3a0] sm:$0xff]
        %v425 = vld [vmem:[%s234 + $0x3a8] sm:$0xff]
        %v426 = vld [vmem:[%s234 + $0x3b0] sm:$0xff]
        %v427 = vld [vmem:[%s234 + $0x3b8] sm:$0xff]
        %v428 = vld [vmem:[%s234 + $0x3c0] sm:$0xff]
        %v429 = vld [vmem:[%s234 + $0x3c8] sm:$0xff]
        %v430 = vld [vmem:[%s234 + $0x3d0] sm:$0xff]
        %v431 = vld [vmem:[%s234 + $0x3d8] sm:$0xff]
        %v432 = vld [vmem:[%s234 + $0x3e0] sm:$0xff]
        %v433 = vld [vmem:[%s234 + $0x3e8] sm:$0xff]
        %v434 = vld [vmem:[%s234 + $0x3f0] sm:$0xff]
        %v435 = vld [vmem:[%s234 + $0x3f8] sm:$0xff]
        %v436 = vld [vmem:[%s290] sm:$0xf]
        %v438 = vlaneseq
        %v439 = vshrl.u32 %v438, 7
        %v440 = vsub.s32 0, %v439
        %v441 = vrot.slane %v436, %v440
        %v442 = vlaneseq
        %v443 = vshrl.u32 %v442, 7
        %v444 = vsub.s32 1, %v443
        %v445 = vrot.slane %v436, %v444
        %v446 = vlaneseq
        %v447 = vshrl.u32 %v446, 7
        %v448 = vsub.s32 2, %v447
        %v449 = vrot.slane %v436, %v448
        %v450 = vlaneseq
        %v451 = vshrl.u32 %v450, 7
        %v452 = vsub.s32 3, %v451
        %v453 = vrot.slane %v436, %v452
        %458 = vmatprep.subr.mxu0 %v309
        %459 = vmatpush1.msra.mxu0 %v308
        %460 = vmatprep.subr.mxu0 %v313
        %461 = vmatpush1.msra.mxu0 %v312
        %462 = vmatprep.subr.mxu0 %v317
        %463 = vmatpush1.msra.mxu0 %v316
        %464 = vmatprep.subr.mxu0 %v321
        %465 = vmatpush1.msra.mxu0 %v320
        %466 = vmatprep.subr.mxu0 %v325
        %467 = vmatpush1.msra.mxu0 %v324
        %468 = vmatprep.subr.mxu0 %v329
        %469 = vmatpush1.msra.mxu0 %v328
        %470 = vmatprep.subr.mxu0 %v333
        %471 = vmatpush1.msra.mxu0 %v332
        %472 = vmatprep.subr.mxu0 %v337
        %473 = vmatpush1.msra.mxu0 %v336
        %474 = vmatprep.subr.mxu0 %v341
        %475 = vmatpush1.msra.mxu0 %v340
        %476 = vmatprep.subr.mxu0 %v345
        %477 = vmatpush1.msra.mxu0 %v344
        %478 = vmatprep.subr.mxu0 %v349
        %479 = vmatpush1.msra.mxu0 %v348
        %480 = vmatprep.subr.mxu0 %v353
        %481 = vmatpush1.msra.mxu0 %v352
        %482 = vmatprep.subr.mxu0 %v357
        %483 = vmatpush1.msra.mxu0 %v356
        %484 = vmatprep.subr.mxu0 %v361
        %485 = vmatpush1.msra.mxu0 %v360
        %486 = vmatprep.subr.mxu0 %v365
        %487 = vmatpush1.msra.mxu0 %v364
        %488 = vmatprep.subr.mxu0 %v369
        %489 = vmatpush1.msra.mxu0 %v368
        %490 = vmatprep.subr.mxu0 %v373
        %491 = vmatpush1.msra.mxu0 %v372
        %492 = vmatprep.subr.mxu0 %v377
        %493 = vmatpush1.msra.mxu0 %v376
        %494 = vmatprep.subr.mxu0 %v381
        %495 = vmatpush1.msra.mxu0 %v380
        %496 = vmatprep.subr.mxu0 %v385
        %497 = vmatpush1.msra.mxu0 %v384
        %498 = vmatprep.subr.mxu0 %v389
        %499 = vmatpush1.msra.mxu0 %v388
        %500 = vmatprep.subr.mxu0 %v393
        %501 = vmatpush1.msra.mxu0 %v392
        %502 = vmatprep.subr.mxu0 %v397
        %503 = vmatpush1.msra.mxu0 %v396
        %504 = vmatprep.subr.mxu0 %v401
        %505 = vmatpush1.msra.mxu0 %v400
        %506 = vmatprep.subr.mxu0 %v405
        %507 = vmatpush1.msra.mxu0 %v404
        %508 = vmatprep.subr.mxu0 %v409
        %509 = vmatpush1.msra.mxu0 %v408
        %510 = vmatprep.subr.mxu0 %v413
        %511 = vmatpush1.msra.mxu0 %v412
        %512 = vmatprep.subr.mxu0 %v417
        %513 = vmatpush1.msra.mxu0 %v416
        %514 = vmatprep.subr.mxu0 %v421
        %515 = vmatpush1.msra.mxu0 %v420
        %516 = vmatprep.subr.mxu0 %v425
        %517 = vmatpush1.msra.mxu0 %v424
        %518 = vmatprep.subr.mxu0 %v429
        %519 = vmatpush1.msra.mxu0 %v428
        %520 = vmatprep.subr.mxu0 %v433
        %521 = vmatpush1.msra.mxu0 %v432
        %522 = vmatprep.mubr.f32.mxu0 %v307
        %523 = vmatmul.mubr.f32.gmra.mrb[0].mxu0 %v306
        %v524 = vpop.f32.mrb[0].mxu0
        %v525 = vadd.f32 %v441, %v524
        %v526 = vpop.f32.mrb[0].mxu0
        %v527 = vadd.f32 %v445, %v526
        %528 = vdwg.mxu0
        %529 = vmatprep.subr.mxu0 %v311
        %530 = vmatpush1.msra.mxu0 %v310
        %531 = vmatprep.subr.mxu0 %v315
        %532 = vmatpush1.msra.mxu0 %v314
        %533 = vmatprep.subr.mxu0 %v319
        %534 = vmatpush1.msra.mxu0 %v318
        %535 = vmatprep.subr.mxu0 %v323
        %536 = vmatpush1.msra.mxu0 %v322
        %537 = vmatprep.subr.mxu0 %v327
        %538 = vmatpush1.msra.mxu0 %v326
        %539 = vmatprep.subr.mxu0 %v331
        %540 = vmatpush1.msra.mxu0 %v330
        %541 = vmatprep.subr.mxu0 %v335
        %542 = vmatpush1.msra.mxu0 %v334
        %543 = vmatprep.subr.mxu0 %v339
        %544 = vmatpush1.msra.mxu0 %v338
        %545 = vmatprep.subr.mxu0 %v343
        %546 = vmatpush1.msra.mxu0 %v342
        %547 = vmatprep.subr.mxu0 %v347
        %548 = vmatpush1.msra.mxu0 %v346
        %549 = vmatprep.subr.mxu0 %v351
        %550 = vmatpush1.msra.mxu0 %v350
        %551 = vmatprep.subr.mxu0 %v355
        %552 = vmatpush1.msra.mxu0 %v354
        %553 = vmatprep.subr.mxu0 %v359
        %554 = vmatpush1.msra.mxu0 %v358
        %555 = vmatprep.subr.mxu0 %v363
        %556 = vmatpush1.msra.mxu0 %v362
        %557 = vmatprep.subr.mxu0 %v367
        %558 = vmatpush1.msra.mxu0 %v366
        %559 = vmatprep.subr.mxu0 %v371
        %560 = vmatpush1.msra.mxu0 %v370
        %561 = vmatprep.subr.mxu0 %v375
        %562 = vmatpush1.msra.mxu0 %v374
        %563 = vmatprep.subr.mxu0 %v379
        %564 = vmatpush1.msra.mxu0 %v378
        %565 = vmatprep.subr.mxu0 %v383
        %566 = vmatpush1.msra.mxu0 %v382
        %567 = vmatprep.subr.mxu0 %v387
        %568 = vmatpush1.msra.mxu0 %v386
        %569 = vmatprep.subr.mxu0 %v391
        %570 = vmatpush1.msra.mxu0 %v390
        %571 = vmatprep.subr.mxu0 %v395
        %572 = vmatpush1.msra.mxu0 %v394
        %573 = vmatprep.subr.mxu0 %v399
        %574 = vmatpush1.msra.mxu0 %v398
        %575 = vmatprep.subr.mxu0 %v403
        %576 = vmatpush1.msra.mxu0 %v402
        %577 = vmatprep.subr.mxu0 %v407
        %578 = vmatpush1.msra.mxu0 %v406
        %579 = vmatprep.subr.mxu0 %v411
        %580 = vmatpush1.msra.mxu0 %v410
        %581 = vmatprep.subr.mxu0 %v415
        %582 = vmatpush1.msra.mxu0 %v414
        %583 = vmatprep.subr.mxu0 %v419
        %584 = vmatpush1.msra.mxu0 %v418
        %585 = vmatprep.subr.mxu0 %v423
        %586 = vmatpush1.msra.mxu0 %v422
        %587 = vmatprep.subr.mxu0 %v427
        %588 = vmatpush1.msra.mxu0 %v426
        %589 = vmatprep.subr.mxu0 %v431
        %590 = vmatpush1.msra.mxu0 %v430
        %591 = vmatprep.subr.mxu0 %v435
        %592 = vmatpush1.msra.mxu0 %v434
        %593 = vmatprep.mubr.f32.mxu0 %v307
        %594 = vmatmul.mubr.f32.gmra.mrb[0].mxu0 %v306
        %v595 = vpop.f32.mrb[0].mxu0
        %v596 = vadd.f32 %v449, %v595
        %v597 = vpop.f32.mrb[0].mxu0
        %v598 = vadd.f32 %v453, %v597
        %599 = vdwg.mxu0
        %v600 = vxor.u32 %v525, 2147483648
        %v601 = vmul.f32 %v600, 1.442695
        %v602 = vpow.pop %v601
        %v603 = vadd.f32 %v602, 1.0
        %v604 = vrcp.pop %v603
        %v605 = vmul.f32 1.0, %v604
        %v606 = vxor.u32 %v527, 2147483648
        %v607 = vmul.f32 %v606, 1.442695
        %v608 = vpow.pop %v607
        %v609 = vadd.f32 %v608, 1.0
        %v610 = vrcp.pop %v609
        %v611 = vmul.f32 1.0, %v610
        %v612 = vmul.f32 %v605, %v598
        %v613 = vadd.f32 %v596, %v612
        %v614 = vtanh.pop %v613
        %v615 = vsub.f32 1.0, %v611
        %v616 = vmul.f32 %v615, %v614
        %v617 = vmul.f32 %v611, %v304
        %v618 = vadd.f32 %v616, %v617
        %619 = vst [vmem:[%s297] sm:$0xff] %v618
        %620 = vst [vmem:[#allocation2] sm:$0xff] %v618
        %p621 = scmp.lt.s32.totalorder %s23, 1
        %s622 = scalar_select %p621, %s23, 1
        %p623 = scmp.lt.s32.totalorder %s22, 0
        %s624 = scalar_select %p623, %s22, 0
        %s625 = sadd.s32 %s624, %s622
        %s626 = smul.addr %s625, 8
        %s627 = scalar_lea.vmem %s4, %s626
        // Predicated region
        $region45: #{_stacked_gru_forward.1} parent=35 // pred_check
          %p628 = pneg %p156
        $region46: #{_stacked_gru_forward.1} parent=35 // pred_check_branch
          %630 = sbr.rel (%p628) target = $region48
        $region47: #{_stacked_gru_forward.1} parent=35 // pred_region
          _
        $region48: #{_stacked_gru_forward.1} parent=35 // pred_fallthru
          _
      $region36: #{_stacked_gru_forward.1} parent=5 // pred_fallthru
        _
      %p631 = scmp.le.s32.totalorder 2, %s13
      // Predicated region
      $region49: #{_stacked_gru_forward.1} parent=5 // pred_check
        %p632 = pneg %p631
      $region50: #{_stacked_gru_forward.1} parent=5 // pred_check_branch
        %634 = sbr.rel (%p632) target = $region52
      $region51: #{_stacked_gru_forward.1} parent=5 // pred_region
        %s635 = ssub.s32 %s13, 2
        // Predicated region
        $region53: #{_stacked_gru_forward.1} parent=51 // pred_check
          %p636 = pneg %p162
        $region54: #{_stacked_gru_forward.1} parent=51 // pred_check_branch
          %638 = sbr.rel (%p636) target = $region56
        $region55: #{_stacked_gru_forward.1} parent=51 // pred_region
          %p639 = scmp.lt.s32.totalorder %s25, 1
          %s640 = scalar_select %p639, %s25, 1
          %p641 = scmp.lt.s32.totalorder %s24, 0
          %s642 = scalar_select %p641, %s24, 0
          %s643 = sadd.s32 %s642, %s640
          %s644 = smul.addr %s643, 8
          %s645 = scalar_lea.vmem %s4, %s644
        $region56: #{_stacked_gru_forward.1} parent=51 // pred_fallthru
          _
      $region52: #{_stacked_gru_forward.1} parent=5 // pred_fallthru
        _
    $region6: #{_stacked_gru_forward.1} parent=1 // loop_footer
      %s17 = sadd.s32 1, %s13
    $region7: #{_stacked_gru_forward.1} parent=1 // loop_footer_branch
      %12 = sbr.rel target = $region3
    $region8: #{_stacked_gru_forward.1} parent=1 // loop_exit
      _
    %646 = vsyncpa [#allocation4], 1
    %s647 = scalar_lea.sflag [#allocation4], 1
    %648 = vsyncpa %s647, 1

</llo_original>
